<compile_context>
chip_gen: v7x
topology: tpu7x:2x2x1
jax: 0.10.0
libtpu: 0.0.40
codegen_flags: <defaults>
</compile_context>

<pallas_src>
import math

import jax
import jax.numpy as jnp
from jax.experimental import pallas as pl
from jax.experimental.pallas import tpu as pltpu

LANE = 128      # vreg lane width: feature dims padded to multiples of this
SUBLANE = 16    # batch-tile granularity (bf16 packs 16 rows/vreg; covers f32's 8 too)
_MiB = 1024 * 1024

_BUFFERED1_OK = None      # probed on first call: does this build accept pl.Buffered(1)?
_VMEM_BUDGET_CACHE = None


def _round_up(x, m):
    return (x + m - 1) // m * m


def _pad2(a, rows, cols):
    pr, pc = rows - a.shape[0], cols - a.shape[1]
    if pr == 0 and pc == 0:
        return a
    return jnp.pad(a, ((0, pr), (0, pc)))


def _default_vmem_budget():
    """~75% of per-core VMEM, capped at 96 MiB.
    v5e/v6e (128 MiB VMEM) -> 96 MiB; v7x (64 MiB per TensorCore) -> 48 MiB.
    Weights are duplicated per core under the 'parallel' batch axis, so the
    per-core number is what matters."""
    global _VMEM_BUDGET_CACHE
    if _VMEM_BUDGET_CACHE is None:
        cap = 64 * _MiB
        try:
            cap = int(pltpu.get_tpu_info().vmem_capacity_bytes)
        except Exception:
            pass
        _VMEM_BUDGET_CACHE = min((cap * 3) // 4, 96 * _MiB)
    return _VMEM_BUDGET_CACHE


def _make_kernel(nh, return_rep):
    """nh = number of hidden-dim tiles (1 => weights fully resident, no accumulator)."""

    def kernel(x_ref, w1_ref, b1_ref, w2_ref, b2_ref, out_ref, *rest):
        rep_ref = rest[0] if return_rep else None
        acc_ref = rest[-1] if nh > 1 else None

        # Cast x in-kernel (free VPU work under MXU/DMA; avoids a wrapper HBM pass).
        xb = x_ref[...].astype(jnp.bfloat16)
        # fc1: bf16 MXU matmul, f32 accumulation, f32 bias add.
        h = jnp.dot(xb, w1_ref[...], preferred_element_type=jnp.float32) + b1_ref[...]
        if return_rep:
            rep_ref[...] = h.astype(rep_ref.dtype)
        # fc2 contribution of this hidden tile.
        contrib = jnp.dot(h.astype(jnp.bfloat16), w2_ref[...],
                          preferred_element_type=jnp.float32)

        if nh == 1:
            out_ref[...] = (contrib + b2_ref[...]).astype(out_ref.dtype)
        else:
            j = pl.program_id(1)

            @pl.when(j == 0)
            def _():
                acc_ref[...] = jnp.zeros_like(acc_ref)

            acc_ref[...] += contrib

            @pl.when(j == pl.num_programs(1) - 1)
            def _():
                out_ref[...] = (acc_ref[...] + b2_ref[...]).astype(out_ref.dtype)

    return kernel


def prepare_params(w1, b1, w2, b2):
    """One-time weight prep (hoisted out of the per-call path): zero-pad feature
    dims to multiples of 128 (exact for linear layers) and cast weights to bf16.
    w1: [input_size, hidden_size], w2: [hidden_size, input_size] (i.e. the
    transpose of PyTorch nn.Linear's [out, in] storage)."""
    input_size, hidden_size = w1.shape
    assert w2.shape == (hidden_size, input_size)
    in_p = _round_up(input_size, LANE)
    hid_p = _round_up(hidden_size, LANE)
    return {
        "w1": _pad2(w1, in_p, hid_p).astype(jnp.bfloat16),
        "b1": _pad2(b1.reshape(1, -1).astype(jnp.float32), 1, hid_p),
        "w2": _pad2(w2, hid_p, in_p).astype(jnp.bfloat16),
        "b2": _pad2(b2.reshape(1, -1).astype(jnp.float32), 1, in_p),
        "input_size": input_size, "hidden_size": hidden_size,
        "in_p": in_p, "hid_p": hid_p,
    }


def aenet_forward(x, params, *, return_rep=True, out_dtype=jnp.float32,
                  vmem_budget_bytes=None, force_hid_tiles=None):
    """x: [B, input_size] float. params: output of prepare_params().
    Returns out [B, input_size] (and rep [B, hidden_size] if return_rep), in
    out_dtype (f32 default; bf16 halves output HBM writeback)."""
    global _BUFFERED1_OK

    B, input_size = x.shape
    assert input_size == params["input_size"]
    hidden_size = params["hidden_size"]
    in_p, hid_p = params["in_p"], params["hid_p"]
    w1_p, b1_p, w2_p, b2_p = params["w1"], params["b1"], params["w2"], params["b2"]

    budget = int(vmem_budget_bytes) if vmem_budget_bytes else _default_vmem_budget()
    out_b = jnp.dtype(out_dtype).itemsize
    rep_b = out_b if return_rep else 0

    # ---- hidden-dim tiling: stream 128k-wide weight tiles if fully resident ----
    # ---- weights would blow the per-core budget (matters on v7x's 64 MiB/TC) ----
    hp128 = hid_p // LANE

    def weight_vmem(nh_):
        # Conservative: assume double-buffered weight tiles (single-buffering of
        # the resident nh==1 case is applied below as bonus headroom, not relied on).
        th_ = hid_p // nh_
        return 2 * (2 * in_p * th_ * 2) + 2 * 8 * th_ * 4 + 2 * 8 * in_p * 4

    if force_hid_tiles is not None:
        assert hp128 % force_hid_tiles == 0, "force_hid_tiles must divide hid_p/128"
        nh = int(force_hid_tiles)
    else:
        nh = None
        for cand in range(1, hp128 + 1):
            if hp128 % cand:
                continue
            if weight_vmem(cand) <= budget // 2:   # keep >= half the budget for activations
                nh = cand
                break
        if nh is None:
            nh = hp128
            # TODO(synk): also tile in_p (fc1's K / fc2's N) when even 128-wide
            # hidden tiles overflow the per-core VMEM budget.
    th = hid_p // nh

    # ---- batch tile: as large as the budget allows (amortizes ~0.35us/step) ------
    per_row = (2 * in_p * 4                 # x tile (f32, double-buffered)
               + 2 * in_p * out_b           # out tile (double-buffered)
               + 2 * th * rep_b             # rep tile (double-buffered)
               + (in_p * 4 if nh > 1 else 0)   # f32 fc2 accumulator scratch
               + 6 * in_p + 6 * th)         # in-kernel temporaries (x bf16, h f32/bf16, fc2 f32)
    tb = min(1024, _round_up(B, SUBLANE))
    while tb > SUBLANE and weight_vmem(nh) + tb * per_row > budget:
        tb = max(SUBLANE, _round_up(tb // 2, SUBLANE))
    if B >= 2 * SUBLANE:                    # >=2 batch tiles so v7x's 2nd TensorCore gets work
        tb = min(tb, _round_up((B + 1) // 2, SUBLANE))
    b_pad = _round_up(B, tb)
    grid_b = b_pad // tb

    vmem_limit = int(max(32 * _MiB, weight_vmem(nh) + tb * per_row + 8 * _MiB))

    # Pad x only (no wrapper-side bf16 cast); skip the pad entirely when unneeded.
    x_p = _pad2(x.astype(jnp.float32), b_pad, in_p)

    out_shapes = [jax.ShapeDtypeStruct((b_pad, in_p), out_dtype)]
    if return_rep:
        out_shapes.append(jax.ShapeDtypeStruct((b_pad, hid_p), out_dtype))

    kernel = _make_kernel(nh, return_rep)
    scratch = [pltpu.VMEM((tb, in_p), jnp.float32)] if nh > 1 else []

    flops = 4 * b_pad * in_p * hid_p        # two matmuls, 2*M*N*K each
    bytes_accessed = (b_pad * in_p * 4 + 2 * in_p * hid_p * 2 + (in_p + hid_p) * 4
                      + b_pad * in_p * out_b + b_pad * hid_p * rep_b)

    def run(single_buffer_resident):
        res_kw = {"pipeline_mode": pl.Buffered(1)} if single_buffer_resident else {}
        w_kw = res_kw if nh == 1 else {}     # weight tiles stream (double-buffer) when nh > 1
        in_specs = [
            pl.BlockSpec((tb, in_p), lambda i, j: (i, 0)),            # x: streamed per batch tile
            pl.BlockSpec((in_p, th), lambda i, j: (0, j), **w_kw),    # W1
            pl.BlockSpec((1, th), lambda i, j: (0, j), **w_kw),       # b1
            pl.BlockSpec((th, in_p), lambda i, j: (j, 0), **w_kw),    # W2
            pl.BlockSpec((1, in_p), lambda i, j: (0, 0), **res_kw),   # b2: always resident
        ]
        out_specs = [pl.BlockSpec((tb, in_p), lambda i, j: (i, 0))]
        if return_rep:
            out_specs.append(pl.BlockSpec((tb, th), lambda i, j: (i, j)))
        return pl.pallas_call(
            kernel,
            out_shape=tuple(out_shapes),
            grid_spec=pltpu.PrefetchScalarGridSpec(
                num_scalar_prefetch=0,
                grid=(grid_b, nh),
                in_specs=in_specs,
                out_specs=tuple(out_specs),
                scratch_shapes=scratch,
            ),
            compiler_params=pltpu.CompilerParams(
                dimension_semantics=("parallel", "arbitrary"),
                vmem_limit_bytes=vmem_limit,
            ),
            cost_estimate=pl.CostEstimate(
                flops=flops, transcendentals=0, bytes_accessed=bytes_accessed),
        )(x_p, w1_p, b1_p, w2_p, b2_p)

    # Probe pl.Buffered(1) support once; fall back to default double-buffering.
    if _BUFFERED1_OK is None:
        try:
            outs = run(True)
            jax.block_until_ready(outs)
            _BUFFERED1_OK = True
        except Exception:
            _BUFFERED1_OK = False
            outs = run(False)
    else:
        outs = run(_BUFFERED1_OK)

    out = outs[0]
    if b_pad != B or in_p != input_size:     # skip un-pad slice when nothing was padded
        out = out[:B, :input_size]
    if return_rep:
        rep = outs[1]
        if b_pad != B or hid_p != hidden_size:
            rep = rep[:B, :hidden_size]
        return out, rep
    return out


def init_params(key, input_size, hidden_size):
    """Mirror AENet.__init__: Linear weights ~ N(0, sqrt(2/(in+hid))); biases keep
    PyTorch's default uniform(-1/sqrt(fan_in), 1/sqrt(fan_in)).
    Weights returned pre-transposed as [in_features, out_features]."""
    k1, k2, k3, k4 = jax.random.split(key, 4)
    std = math.sqrt(2.0 / (input_size + hidden_size))
    w1 = std * jax.random.normal(k1, (input_size, hidden_size), dtype=jnp.float32)
    b1 = jax.random.uniform(k2, (hidden_size,), dtype=jnp.float32,
                            minval=-1.0 / math.sqrt(input_size),
                            maxval=1.0 / math.sqrt(input_size))
    w2 = std * jax.random.normal(k3, (hidden_size, input_size), dtype=jnp.float32)
    b2 = jax.random.uniform(k4, (input_size,), dtype=jnp.float32,
                            minval=-1.0 / math.sqrt(hidden_size),
                            maxval=1.0 / math.sqrt(hidden_size))
    return w1, b1, w2, b2


if __name__ == "__main__":
    key = jax.random.PRNGKey(0)

    # --- AENet(input_size=64, hidden_size=32), batch=8 --------------------------
    batch, input_size, hidden_size = 8, 64, 32
    kx, kp, kx2, kp2 = jax.random.split(key, 4)
    x = jax.random.normal(kx, (batch, input_size), dtype=jnp.float32)
    w1, b1, w2, b2 = init_params(kp, input_size, hidden_size)
    params = prepare_params(w1, b1, w2, b2)     # weight pad/cast done ONCE, reused

    out, rep = aenet_forward(x, params, return_rep=True)    # eval mode (keeps self.rep)
    out_only = aenet_forward(x, params, return_rep=False)   # train mode (no rep writeback)
    out_bf16 = aenet_forward(x, params, return_rep=False, out_dtype=jnp.bfloat16)

    # --- exercise the weight-streaming (hidden-dim split) path at small scale ----
    batch2, in2, hid2 = 48, 128, 256
    x2 = jax.random.normal(kx2, (batch2, in2), dtype=jnp.float32)
    w1b, b1b, w2b, b2b = init_params(kp2, in2, hid2)
    params2 = prepare_params(w1b, b1b, w2b, b2b)
    out2, rep2 = aenet_forward(x2, params2, return_rep=True, force_hid_tiles=2)

    jax.block_until_ready((out, rep, out_only, out_bf16, out2, rep2))

    # Pure-JAX reference with the same bf16-matmul / f32-accumulate numerics.
    def reference(x_, w1_, b1_, w2_, b2_):
        h = jnp.dot(x_.astype(jnp.bfloat16), w1_.astype(jnp.bfloat16),
                    preferred_element_type=jnp.float32) + b1_[None, :]
        o = jnp.dot(h.astype(jnp.bfloat16), w2_.astype(jnp.bfloat16),
                    preferred_element_type=jnp.float32) + b2_[None, :]
        return o, h

    o_ref, h_ref = reference(x, w1, b1, w2, b2)
    assert jnp.allclose(rep, h_ref, atol=2e-3, rtol=2e-3)
    assert jnp.allclose(out, o_ref, atol=2e-3, rtol=2e-3)
    assert jnp.allclose(out_only, out, atol=1e-5, rtol=1e-5)
    assert jnp.allclose(out_bf16.astype(jnp.float32), o_ref, atol=5e-2, rtol=5e-2)

    o_ref2, h_ref2 = reference(x2, w1b, b1b, w2b, b2b)
    assert jnp.allclose(rep2, h_ref2, atol=2e-3, rtol=2e-3)
    assert jnp.allclose(out2, o_ref2, atol=2e-3, rtol=2e-3)

    print("KERNEL_OK")
</pallas_src>

<mosaic_0001>
module attributes {stable_mosaic.version = 11 : i64} {
  func.func @kernel(%arg0: i32, %arg1: i32, %arg2: memref<16x128xf32, #tpu.memory_space<vmem>>, %arg3: memref<128x128xbf16, #tpu.memory_space<vmem>>, %arg4: memref<1x128xf32, #tpu.memory_space<vmem>>, %arg5: memref<128x128xbf16, #tpu.memory_space<vmem>>, %arg6: memref<1x128xf32, #tpu.memory_space<vmem>>, %arg7: memref<16x128xf32, #tpu.memory_space<vmem>>, %arg8: memref<16x128xf32, #tpu.memory_space<vmem>>) attributes {dimension_semantics = [#tpu.dimension_semantics<parallel>, #tpu.dimension_semantics<arbitrary>], iteration_bounds = array<i64: 1, 1>, scalar_prefetch = 0 : i64, scratch_operands = 0 : i64, tpu.core_type = #tpu.core_type<tc>, window_params = [{transform_indices = @transform_0, window_bounds = array<i64: 16, 128>}, {pipeline_mode = #tpu.pipeline_mode<synchronous>, transform_indices = @transform_1, window_bounds = array<i64: 128, 128>}, {pipeline_mode = #tpu.pipeline_mode<synchronous>, transform_indices = @transform_2, window_bounds = array<i64: 1, 128>}, {pipeline_mode = #tpu.pipeline_mode<synchronous>, transform_indices = @transform_3, window_bounds = array<i64: 128, 128>}, {pipeline_mode = #tpu.pipeline_mode<synchronous>, transform_indices = @transform_4, window_bounds = array<i64: 1, 128>}, {transform_indices = @transform_5, window_bounds = array<i64: 16, 128>}, {transform_indices = @transform_6, window_bounds = array<i64: 16, 128>}]} {
    %c0 = arith.constant 0 : index
    %c0_0 = arith.constant 0 : index
    %0 = vector.load %arg2[%c0, %c0_0] : memref<16x128xf32, #tpu.memory_space<vmem>>, vector<16x128xf32>
    %1 = arith.truncf %0 : vector<16x128xf32> to vector<16x128xbf16>
    %c0_1 = arith.constant 0 : index
    %c0_2 = arith.constant 0 : index
    %2 = vector.load %arg3[%c0_1, %c0_2] : memref<128x128xbf16, #tpu.memory_space<vmem>>, vector<128x128xbf16>
    %cst = arith.constant dense<0.000000e+00> : vector<16x128xf32>
    %3 = tpu.matmul %1, %2, %cst {dimension_numbers = #tpu.dot_dimension_numbers<[1], [0], [0], [1], [0, 0, 1, 1], [], []>} : vector<16x128xbf16>, vector<128x128xbf16>, vector<16x128xf32> -> vector<16x128xf32>
    %c0_3 = arith.constant 0 : index
    %c0_4 = arith.constant 0 : index
    %4 = vector.load %arg4[%c0_3, %c0_4] : memref<1x128xf32, #tpu.memory_space<vmem>>, vector<1x128xf32>
    %5 = vector.broadcast %4 : vector<1x128xf32> to vector<16x128xf32>
    %6 = arith.addf %3, %5 : vector<16x128xf32>
    %c0_5 = arith.constant 0 : index
    %c0_6 = arith.constant 0 : index
    %7 = vector.load %arg8[%c0_5, %c0_6] : memref<16x128xf32, #tpu.memory_space<vmem>>, vector<16x128xf32>
    tpu.vector_store %arg8[%c0_5, %c0_6], %6 {strides = array<i32>} : memref<16x128xf32, #tpu.memory_space<vmem>>, vector<16x128xf32>,
    %8 = arith.truncf %6 : vector<16x128xf32> to vector<16x128xbf16>
    %c0_7 = arith.constant 0 : index
    %c0_8 = arith.constant 0 : index
    %9 = vector.load %arg5[%c0_7, %c0_8] : memref<128x128xbf16, #tpu.memory_space<vmem>>, vector<128x128xbf16>
    %cst_9 = arith.constant dense<0.000000e+00> : vector<16x128xf32>
    %10 = tpu.matmul %8, %9, %cst_9 {dimension_numbers = #tpu.dot_dimension_numbers<[1], [0], [0], [1], [0, 0, 1, 1], [], []>} : vector<16x128xbf16>, vector<128x128xbf16>, vector<16x128xf32> -> vector<16x128xf32>
    %c0_10 = arith.constant 0 : index
    %c0_11 = arith.constant 0 : index
    %11 = vector.load %arg6[%c0_10, %c0_11] : memref<1x128xf32, #tpu.memory_space<vmem>>, vector<1x128xf32>
    %12 = vector.broadcast %11 : vector<1x128xf32> to vector<16x128xf32>
    %13 = arith.addf %10, %12 : vector<16x128xf32>
    %c0_12 = arith.constant 0 : index
    %c0_13 = arith.constant 0 : index
    %14 = vector.load %arg7[%c0_12, %c0_13] : memref<16x128xf32, #tpu.memory_space<vmem>>, vector<16x128xf32>
    tpu.vector_store %arg7[%c0_12, %c0_13], %13 {strides = array<i32>} : memref<16x128xf32, #tpu.memory_space<vmem>>, vector<16x128xf32>,
    return
  }
  func.func @transform_0(%arg0: i32, %arg1: i32) -> (i32, i32) {
    %c0_i32 = arith.constant 0 : i32
    %c0_i32_0 = arith.constant 0 : i32
    return %arg0, %c0_i32 : i32, i32
  }
  func.func @transform_1(%arg0: i32, %arg1: i32) -> (i32, i32) {
    %c0_i32 = arith.constant 0 : i32
    %c0_i32_0 = arith.constant 0 : i32
    return %c0_i32, %arg1 : i32, i32
  }
  func.func @transform_2(%arg0: i32, %arg1: i32) -> (i32, i32) {
    %c0_i32 = arith.constant 0 : i32
    %c0_i32_0 = arith.constant 0 : i32
    return %c0_i32, %arg1 : i32, i32
  }
  func.func @transform_3(%arg0: i32, %arg1: i32) -> (i32, i32) {
    %c0_i32 = arith.constant 0 : i32
    %c0_i32_0 = arith.constant 0 : i32
    return %arg1, %c0_i32 : i32, i32
  }
  func.func @transform_4(%arg0: i32, %arg1: i32) -> (i32, i32) {
    %c0_i32 = arith.constant 0 : i32
    %c0_i32_0 = arith.constant 0 : i32
    %c0_i32_1 = arith.constant 0 : i32
    return %c0_i32, %c0_i32_0 : i32, i32
  }
  func.func @transform_5(%arg0: i32, %arg1: i32) -> (i32, i32) {
    %c0_i32 = arith.constant 0 : i32
    %c0_i32_0 = arith.constant 0 : i32
    return %arg0, %c0_i32 : i32, i32
  }
  func.func @transform_6(%arg0: i32, %arg1: i32) -> (i32, i32) {
    %c0_i32 = arith.constant 0 : i32
    return %arg0, %arg1 : i32, i32
  }
}

module attributes {stable_mosaic.version = 11 : i64} {
  func.func @kernel(%arg0: i32, %arg1: i32, %arg2: memref<16x128xf32, #tpu.memory_space<vmem>>, %arg3: memref<128x128xbf16, #tpu.memory_space<vmem>>, %arg4: memref<1x128xf32, #tpu.memory_space<vmem>>, %arg5: memref<128x128xbf16, #tpu.memory_space<vmem>>, %arg6: memref<1x128xf32, #tpu.memory_space<vmem>>, %arg7: memref<16x128xf32, #tpu.memory_space<vmem>>, %arg8: memref<16x128xf32, #tpu.memory_space<vmem>>) attributes {dimension_semantics = [#tpu.dimension_semantics<parallel>, #tpu.dimension_semantics<arbitrary>], iteration_bounds = array<i64: 1, 1>, scalar_prefetch = 0 : i64, scratch_operands = 0 : i64, tpu.core_type = #tpu.core_type<tc>, window_params = [{transform_indices = @transform_0, window_bounds = array<i64: 16, 128>}, {transform_indices = @transform_1, window_bounds = array<i64: 128, 128>}, {transform_indices = @transform_2, window_bounds = array<i64: 1, 128>}, {transform_indices = @transform_3, window_bounds = array<i64: 128, 128>}, {pipeline_mode = #tpu.pipeline_mode<synchronous>, transform_indices = @transform_4, window_bounds = array<i64: 1, 128>}, {transform_indices = @transform_5, window_bounds = array<i64: 16, 128>}, {transform_indices = @transform_6, window_bounds = array<i64: 16, 128>}]} {
    %c0 = arith.constant 0 : index
    %c0_0 = arith.constant 0 : index
    %0 = vector.load %arg2[%c0, %c0_0] : memref<16x128xf32, #tpu.memory_space<vmem>>, vector<16x128xf32>
    %1 = arith.truncf %0 : vector<16x128xf32> to vector<16x128xbf16>
    %c0_1 = arith.constant 0 : index
    %c0_2 = arith.constant 0 : index
    %2 = vector.load %arg3[%c0_1, %c0_2] : memref<128x128xbf16, #tpu.memory_space<vmem>>, vector<128x128xbf16>
    %cst = arith.constant dense<0.000000e+00> : vector<16x128xf32>
    %3 = tpu.matmul %1, %2, %cst {dimension_numbers = #tpu.dot_dimension_numbers<[1], [0], [0], [1], [0, 0, 1, 1], [], []>} : vector<16x128xbf16>, vector<128x128xbf16>, vector<16x128xf32> -> vector<16x128xf32>
    %c0_3 = arith.constant 0 : index
    %c0_4 = arith.constant 0 : index
    %4 = vector.load %arg4[%c0_3, %c0_4] : memref<1x128xf32, #tpu.memory_space<vmem>>, vector<1x128xf32>
    %5 = vector.broadcast %4 : vector<1x128xf32> to vector<16x128xf32>
    %6 = arith.addf %3, %5 : vector<16x128xf32>
    %c0_5 = arith.constant 0 : index
    %c0_6 = arith.constant 0 : index
    %7 = vector.load %arg8[%c0_5, %c0_6] : memref<16x128xf32, #tpu.memory_space<vmem>>, vector<16x128xf32>
    tpu.vector_store %arg8[%c0_5, %c0_6], %6 {strides = array<i32>} : memref<16x128xf32, #tpu.memory_space<vmem>>, vector<16x128xf32>,
    %8 = arith.truncf %6 : vector<16x128xf32> to vector<16x128xbf16>
    %c0_7 = arith.constant 0 : index
    %c0_8 = arith.constant 0 : index
    %9 = vector.load %arg5[%c0_7, %c0_8] : memref<128x128xbf16, #tpu.memory_space<vmem>>, vector<128x128xbf16>
    %cst_9 = arith.constant dense<0.000000e+00> : vector<16x128xf32>
    %10 = tpu.matmul %8, %9, %cst_9 {dimension_numbers = #tpu.dot_dimension_numbers<[1], [0], [0], [1], [0, 0, 1, 1], [], []>} : vector<16x128xbf16>, vector<128x128xbf16>, vector<16x128xf32> -> vector<16x128xf32>
    %c0_10 = arith.constant 0 : index
    %c0_11 = arith.constant 0 : index
    %11 = vector.load %arg6[%c0_10, %c0_11] : memref<1x128xf32, #tpu.memory_space<vmem>>, vector<1x128xf32>
    %12 = vector.broadcast %11 : vector<1x128xf32> to vector<16x128xf32>
    %13 = arith.addf %10, %12 : vector<16x128xf32>
    %c0_12 = arith.constant 0 : index
    %c0_13 = arith.constant 0 : index
    %14 = vector.load %arg7[%c0_12, %c0_13] : memref<16x128xf32, #tpu.memory_space<vmem>>, vector<16x128xf32>
    tpu.vector_store %arg7[%c0_12, %c0_13], %13 {strides = array<i32>} : memref<16x128xf32, #tpu.memory_space<vmem>>, vector<16x128xf32>,
    return
  }
  func.func @transform_0(%arg0: i32, %arg1: i32) -> (i32, i32) {
    %c0_i32 = arith.constant 0 : i32
    %c0_i32_0 = arith.constant 0 : i32
    return %arg0, %c0_i32 : i32, i32
  }
  func.func @transform_1(%arg0: i32, %arg1: i32) -> (i32, i32) {
    %c0_i32 = arith.constant 0 : i32
    %c0_i32_0 = arith.constant 0 : i32
    return %c0_i32, %arg1 : i32, i32
  }
  func.func @transform_2(%arg0: i32, %arg1: i32) -> (i32, i32) {
    %c0_i32 = arith.constant 0 : i32
    %c0_i32_0 = arith.constant 0 : i32
    return %c0_i32, %arg1 : i32, i32
  }
  func.func @transform_3(%arg0: i32, %arg1: i32) -> (i32, i32) {
    %c0_i32 = arith.constant 0 : i32
    %c0_i32_0 = arith.constant 0 : i32
    return %arg1, %c0_i32 : i32, i32
  }
  func.func @transform_4(%arg0: i32, %arg1: i32) -> (i32, i32) {
    %c0_i32 = arith.constant 0 : i32
    %c0_i32_0 = arith.constant 0 : i32
    %c0_i32_1 = arith.constant 0 : i32
    return %c0_i32, %c0_i32_0 : i32, i32
  }
  func.func @transform_5(%arg0: i32, %arg1: i32) -> (i32, i32) {
    %c0_i32 = arith.constant 0 : i32
    %c0_i32_0 = arith.constant 0 : i32
    return %arg0, %c0_i32 : i32, i32
  }
  func.func @transform_6(%arg0: i32, %arg1: i32) -> (i32, i32) {
    %c0_i32 = arith.constant 0 : i32
    return %arg0, %arg1 : i32, i32
  }
}

</mosaic_0001>

<llo_original>
// kernel: tpu_custom_call.1
$region0: #{tpu_custom_call.1}
  #allocation0 [shape = 'u32[]', space=smem, size = 0x4, offset = 0x4, fixed_abs, tag = 'smem constant byte address 0x4 - core index']
  #allocation1 [shape = 'u32[144,128]{1,0:T(1,128)}', space=vmem, size = 0x12000, scoped, tag = 'internal scratch']
  %s0 = inlined_call_operand.hbm [shape: f32[16,128], index: 0, kind: input, shape index: {}]
  %s1 = inlined_call_operand.hbm [shape: bf16[128,128], index: 1, kind: input, shape index: {}]
  %s2 = inlined_call_operand.vmem [shape: f32[1,128], index: 2, kind: input, shape index: {}]
  %s3 = inlined_call_operand.hbm [shape: bf16[128,128], index: 3, kind: input, shape index: {}]
  %s4 = inlined_call_operand.vmem [shape: f32[1,128], index: 4, kind: input, shape index: {}]
  %s5 = inlined_call_operand.hbm [shape: f32[16,128], index: 5, kind: output, shape index: {0}]
  %s6 = inlined_call_operand.hbm [shape: f32[16,128], index: 6, kind: output, shape index: {1}]
  %7 = xla_tuple %s5, %s6
  %s8 = sld [smem:[#allocation0]]
  $region50: #{tpu_custom_call.1} parent=0
    _
  %s10 = ssub.s32 1, %s8
  %s11 = scalar_select 0, %s10, %s8
  $region1: #{tpu_custom_call.1} parent=0
    #allocation2 [shape = 'u8[8192]{0}', space=vmem, size = 0x2000, scoped, tag = 'input window, operand 0, single buffered']
    #allocation3 [shape = 's32[1]{0}', space=sflag, size = 0x4, scoped, tag = 'scoped memory for tpu_custom_call.1']
    #allocation4 [shape = 's32[1]{0}', space=sflag, size = 0x4, scoped, tag = 'scoped memory for tpu_custom_call.1']
    #allocation5 [shape = 'u8[32768]{0}', space=vmem, size = 0x8000, scoped, tag = 'input window, operand 1, single buffered']
    #allocation6 [shape = 's32[1]{0}', space=sflag, size = 0x4, scoped, tag = 'scoped memory for tpu_custom_call.1']
    #allocation7 [shape = 'u8[32768]{0}', space=vmem, size = 0x8000, scoped, tag = 'input window, operand 3, single buffered']
    #allocation8 [shape = 'u8[8192]{0}', space=vmem, size = 0x2000, scoped, tag = 'output window, operand 0, single buffered']
    #allocation9 [shape = 'u8[8192]{0}', space=vmem, size = 0x2000, scoped, tag = 'output window, operand 1, single buffered']
    #allocation10 [shape = 's32[1]{0}', space=sflag, size = 0x4, scoped, tag = 'scoped memory for tpu_custom_call.1']
    %12 = vsyncpa [#allocation3], 0
    %13 = vsyncpa [#allocation6], 0
    %14 = vsyncpa [#allocation4], 0
    %15 = vsyncpa [#allocation10], 0
    // Predicated region
    $region2: #{tpu_custom_call.1} parent=1 // pred_check
      _
    $region3: #{tpu_custom_call.1} parent=1 // pred_check_branch
      %17 = sbr.rel (0) target = $region5
    $region4: #{tpu_custom_call.1} parent=1 // pred_region
      %s19 = ssub.s32 256, 256
      %20 = vsyncadd [#allocation3], %s19
      %s21 = sshll.u32 [#allocation2], 4
      %s22 = int_to_ptr.vmem [resolvable:$true] %s21
      %27 = dma.hbm_to_vmem [thread:$0]  %s0, 256, %s22, [#allocation3], 128, 128, 8
    $region5: #{tpu_custom_call.1} parent=1 // pred_fallthru
      _
    // Predicated region
    $region6: #{tpu_custom_call.1} parent=1 // pred_check
      _
    $region7: #{tpu_custom_call.1} parent=1 // pred_check_branch
      %29 = sbr.rel (0) target = $region9
    $region8: #{tpu_custom_call.1} parent=1 // pred_region
      %s31 = ssub.s32 1024, 1024
      %32 = vsyncadd [#allocation6], %s31
      %s33 = sshll.u32 [#allocation5], 4
      %s34 = int_to_ptr.vmem [resolvable:$true] %s33
      %39 = dma.hbm_to_vmem [thread:$0]  %s1, 1024, %s34, [#allocation6], 64, 64, 4
    $region9: #{tpu_custom_call.1} parent=1 // pred_fallthru
      _
    // Predicated region
    $region10: #{tpu_custom_call.1} parent=1 // pred_check
      _
    $region11: #{tpu_custom_call.1} parent=1 // pred_check_branch
      %41 = sbr.rel (0) target = $region13
    $region12: #{tpu_custom_call.1} parent=1 // pred_region
      _
    $region13: #{tpu_custom_call.1} parent=1 // pred_fallthru
      _
    // Predicated region
    $region14: #{tpu_custom_call.1} parent=1 // pred_check
      _
    $region15: #{tpu_custom_call.1} parent=1 // pred_check_branch
      %43 = sbr.rel (0) target = $region17
    $region16: #{tpu_custom_call.1} parent=1 // pred_region
      %s45 = ssub.s32 1024, 1024
      %46 = vsyncadd [#allocation6], %s45
      %s47 = sshll.u32 [#allocation7], 4
      %s48 = int_to_ptr.vmem [resolvable:$true] %s47
      %53 = dma.hbm_to_vmem [thread:$0]  %s3, 1024, %s48, [#allocation6], 64, 64, 4
    $region17: #{tpu_custom_call.1} parent=1 // pred_fallthru
      _
    // Predicated region
    $region18: #{tpu_custom_call.1} parent=1 // pred_check
      _
    $region19: #{tpu_custom_call.1} parent=1 // pred_check_branch
      %55 = sbr.rel (0) target = $region21
    $region20: #{tpu_custom_call.1} parent=1 // pred_region
      _
    $region21: #{tpu_custom_call.1} parent=1 // pred_fallthru
      _
    // Predicated region
    $region22: #{tpu_custom_call.1} parent=1 // pred_check
      _
    $region23: #{tpu_custom_call.1} parent=1 // pred_check_branch
      %57 = sbr.rel (0) target = $region25
    $region24: #{tpu_custom_call.1} parent=1 // pred_region
      %58 = dma.done [#allocation3], 256
    $region25: #{tpu_custom_call.1} parent=1 // pred_fallthru
      _
    // Predicated region
    $region26: #{tpu_custom_call.1} parent=1 // pred_check
      _
    $region27: #{tpu_custom_call.1} parent=1 // pred_check_branch
      %60 = sbr.rel (0) target = $region29
    $region28: #{tpu_custom_call.1} parent=1 // pred_region
      %61 = dma.done [#allocation6], 1024
    $region29: #{tpu_custom_call.1} parent=1 // pred_fallthru
      _
    // Predicated region
    $region30: #{tpu_custom_call.1} parent=1 // pred_check
      _
    $region31: #{tpu_custom_call.1} parent=1 // pred_check_branch
      %63 = sbr.rel (0) target = $region33
    $region32: #{tpu_custom_call.1} parent=1 // pred_region
      %64 = dma.done [#allocation6], 1024
    $region33: #{tpu_custom_call.1} parent=1 // pred_fallthru
      _
    %v66 = vld [vmem:[#allocation2] sm:$0xff]
    %v67 = vld [vmem:[#allocation2 + $0x8] sm:$0xff]
    %v68 = vpack.c.bf16 %v67, %v66
    %v69 = vld [vmem:[#allocation5] sm:$0xf]
    %v70 = vld [vmem:[#allocation5 + $0x4] sm:$0xf]
    %v71 = vld [vmem:[#allocation5 + $0x8] sm:$0xf]
    %v72 = vld [vmem:[#allocation5 + $0xc] sm:$0xf]
    %v73 = vld [vmem:[#allocation5 + $0x10] sm:$0xf]
    %v74 = vld [vmem:[#allocation5 + $0x14] sm:$0xf]
    %v75 = vld [vmem:[#allocation5 + $0x18] sm:$0xf]
    %v76 = vld [vmem:[#allocation5 + $0x1c] sm:$0xf]
    %v77 = vld [vmem:[#allocation5 + $0x20] sm:$0xf]
    %v78 = vld [vmem:[#allocation5 + $0x24] sm:$0xf]
    %v79 = vld [vmem:[#allocation5 + $0x28] sm:$0xf]
    %v80 = vld [vmem:[#allocation5 + $0x2c] sm:$0xf]
    %v81 = vld [vmem:[#allocation5 + $0x30] sm:$0xf]
    %v82 = vld [vmem:[#allocation5 + $0x34] sm:$0xf]
    %v83 = vld [vmem:[#allocation5 + $0x38] sm:$0xf]
    %v84 = vld [vmem:[#allocation5 + $0x3c] sm:$0xf]
    %v85 = vld [vmem:[%s2] sm:$0x1]
    %v87 = vlaneseq
    %v88 = vshrl.u32 %v87, 7
    %v89 = vsub.s32 0, %v88
    %v90 = vrot.slane %v85, %v89
    %v108 = vunpack.c.l.b16 %v69
    %v109 = vunpack.c.l.b16 %v70
    %v110 = vunpack.c.l.b16 %v71
    %v111 = vunpack.c.l.b16 %v72
    %v112 = vunpack.c.l.b16 %v73
    %v113 = vunpack.c.l.b16 %v74
    %v114 = vunpack.c.l.b16 %v75
    %v115 = vunpack.c.l.b16 %v76
    %v116 = vunpack.c.l.b16 %v77
    %v117 = vunpack.c.l.b16 %v78
    %v118 = vunpack.c.l.b16 %v79
    %v119 = vunpack.c.l.b16 %v80
    %v120 = vunpack.c.l.b16 %v81
    %v121 = vunpack.c.l.b16 %v82
    %v122 = vunpack.c.l.b16 %v83
    %v123 = vunpack.c.l.b16 %v84
    %v124 = vpack.c.b16 %v109, %v108
    %v125 = vpack.c.b16 %v111, %v110
    %v126 = vpack.c.b16 %v113, %v112
    %v127 = vpack.c.b16 %v115, %v114
    %v128 = vpack.c.b16 %v117, %v116
    %v129 = vpack.c.b16 %v119, %v118
    %v130 = vpack.c.b16 %v121, %v120
    %v131 = vpack.c.b16 %v123, %v122
    %140 = vmatprep.subr.bf16.mxu0 0
    %141 = vmatpush1.bf16.msra.mxu0 %v124
    %142 = vmatprep.subr.bf16.mxu0 0
    %143 = vmatpush1.bf16.msra.mxu0 %v125
    %144 = vmatprep.subr.bf16.mxu0 0
    %145 = vmatpush1.bf16.msra.mxu0 %v126
    %146 = vmatprep.subr.bf16.mxu0 0
    %147 = vmatpush1.bf16.msra.mxu0 %v127
    %148 = vmatprep.subr.bf16.mxu0 0
    %149 = vmatpush1.bf16.msra.mxu0 %v128
    %150 = vmatprep.subr.bf16.mxu0 0
    %151 = vmatpush1.bf16.msra.mxu0 %v129
    %152 = vmatprep.subr.bf16.mxu0 0
    %153 = vmatpush1.bf16.msra.mxu0 %v130
    %154 = vmatprep.subr.bf16.mxu0 0
    %155 = vmatpush1.bf16.msra.mxu0 %v131
    %156 = vmatprep.subr.bf16.mxu0 0
    %157 = vmatpush1.bf16.msra.mxu0 0
    %158 = vmatprep.subr.bf16.mxu0 0
    %159 = vmatpush1.bf16.msra.mxu0 0
    %160 = vmatprep.subr.bf16.mxu0 0
    %161 = vmatpush1.bf16.msra.mxu0 0
    %162 = vmatprep.subr.bf16.mxu0 0
    %163 = vmatpush1.bf16.msra.mxu0 0
    %164 = vmatprep.subr.bf16.mxu0 0
    %165 = vmatpush1.bf16.msra.mxu0 0
    %166 = vmatprep.subr.bf16.mxu0 0
    %167 = vmatpush1.bf16.msra.mxu0 0
    %168 = vmatprep.subr.bf16.mxu0 0
    %169 = vmatpush1.bf16.msra.mxu0 0
    %170 = vmatprep.subr.bf16.mxu0 0
    %171 = vmatpush1.bf16.msra.mxu0 0
    %172 = vmatprep.mubr.bf16.mxu0 0
    %173 = vmatmul.mubr.bf16.gmra.mrb[0].mxu0 %v68
    %v174 = vpop.f32.mrb[0].mxu0
    %v175 = vadd.f32 %v90, %v174
    %v176 = vpop.f32.mrb[0].mxu0
    %v177 = vpop.f32.mrb[0].mxu0
    %v178 = vadd.f32 %v90, %v177
    %v179 = vpop.f32.mrb[0].mxu0
    %180 = vdwg.mxu0
    %181 = vst [vmem:[#allocation9] sm:$0xff] %v175
    %182 = vst [vmem:[#allocation9 + $0x8] sm:$0xff] %v178
    %v183 = vpack.c.bf16 %v178, %v175
    %v184 = vld [vmem:[#allocation7] sm:$0xf]
    %v185 = vld [vmem:[#allocation7 + $0x4] sm:$0xf]
    %v186 = vld [vmem:[#allocation7 + $0x8] sm:$0xf]
    %v187 = vld [vmem:[#allocation7 + $0xc] sm:$0xf]
    %v188 = vld [vmem:[#allocation7 + $0x10] sm:$0xf]
    %v189 = vld [vmem:[#allocation7 + $0x14] sm:$0xf]
    %v190 = vld [vmem:[#allocation7 + $0x18] sm:$0xf]
    %v191 = vld [vmem:[#allocation7 + $0x1c] sm:$0xf]
    %v192 = vld [vmem:[#allocation7 + $0x20] sm:$0xf]
    %v193 = vld [vmem:[#allocation7 + $0x24] sm:$0xf]
    %v194 = vld [vmem:[#allocation7 + $0x28] sm:$0xf]
    %v195 = vld [vmem:[#allocation7 + $0x2c] sm:$0xf]
    %v196 = vld [vmem:[#allocation7 + $0x30] sm:$0xf]
    %v197 = vld [vmem:[#allocation7 + $0x34] sm:$0xf]
    %v198 = vld [vmem:[#allocation7 + $0x38] sm:$0xf]
    %v199 = vld [vmem:[#allocation7 + $0x3c] sm:$0xf]
    %v200 = vld [vmem:[%s4] sm:$0x1]
    %v202 = vlaneseq
    %v203 = vshrl.u32 %v202, 7
    %v204 = vsub.s32 0, %v203
    %v205 = vrot.slane %v200, %v204
    %v223 = vunpack.c.l.b16 %v184
    %v224 = vunpack.c.l.b16 %v185
    %v225 = vunpack.c.l.b16 %v186
    %v226 = vunpack.c.l.b16 %v187
    %v227 = vunpack.c.l.b16 %v188
    %v228 = vunpack.c.l.b16 %v189
    %v229 = vunpack.c.l.b16 %v190
    %v230 = vunpack.c.l.b16 %v191
    %v231 = vunpack.c.l.b16 %v192
    %v232 = vunpack.c.l.b16 %v193
    %v233 = vunpack.c.l.b16 %v194
    %v234 = vunpack.c.l.b16 %v195
    %v235 = vunpack.c.l.b16 %v196
    %v236 = vunpack.c.l.b16 %v197
    %v237 = vunpack.c.l.b16 %v198
    %v238 = vunpack.c.l.b16 %v199
    %v239 = vpack.c.b16 %v224, %v223
    %v240 = vpack.c.b16 %v226, %v225
    %v241 = vpack.c.b16 %v228, %v227
    %v242 = vpack.c.b16 %v230, %v229
    %v243 = vpack.c.b16 %v232, %v231
    %v244 = vpack.c.b16 %v234, %v233
    %v245 = vpack.c.b16 %v236, %v235
    %v246 = vpack.c.b16 %v238, %v237
    %255 = vmatprep.subr.bf16.mxu0 0
    %256 = vmatpush1.bf16.msra.mxu0 %v239
    %257 = vmatprep.subr.bf16.mxu0 0
    %258 = vmatpush1.bf16.msra.mxu0 %v240
    %259 = vmatprep.subr.bf16.mxu0 0
    %260 = vmatpush1.bf16.msra.mxu0 %v241
    %261 = vmatprep.subr.bf16.mxu0 0
    %262 = vmatpush1.bf16.msra.mxu0 %v242
    %263 = vmatprep.subr.bf16.mxu0 0
    %264 = vmatpush1.bf16.msra.mxu0 %v243
    %265 = vmatprep.subr.bf16.mxu0 0
    %266 = vmatpush1.bf16.msra.mxu0 %v244
    %267 = vmatprep.subr.bf16.mxu0 0
    %268 = vmatpush1.bf16.msra.mxu0 %v245
    %269 = vmatprep.subr.bf16.mxu0 0
    %270 = vmatpush1.bf16.msra.mxu0 %v246
    %271 = vmatprep.subr.bf16.mxu0 0
    %272 = vmatpush1.bf16.msra.mxu0 0
    %273 = vmatprep.subr.bf16.mxu0 0
    %274 = vmatpush1.bf16.msra.mxu0 0
    %275 = vmatprep.subr.bf16.mxu0 0
    %276 = vmatpush1.bf16.msra.mxu0 0
    %277 = vmatprep.subr.bf16.mxu0 0
    %278 = vmatpush1.bf16.msra.mxu0 0
    %279 = vmatprep.subr.bf16.mxu0 0
    %280 = vmatpush1.bf16.msra.mxu0 0
    %281 = vmatprep.subr.bf16.mxu0 0
    %282 = vmatpush1.bf16.msra.mxu0 0
    %283 = vmatprep.subr.bf16.mxu0 0
    %284 = vmatpush1.bf16.msra.mxu0 0
    %285 = vmatprep.subr.bf16.mxu0 0
    %286 = vmatpush1.bf16.msra.mxu0 0
    %287 = vmatprep.mubr.bf16.mxu0 0
    %288 = vmatmul.mubr.bf16.gmra.mrb[0].mxu0 %v183
    %v289 = vpop.f32.mrb[0].mxu0
    %v290 = vadd.f32 %v205, %v289
    %v291 = vpop.f32.mrb[0].mxu0
    %v292 = vpop.f32.mrb[0].mxu0
    %v293 = vadd.f32 %v205, %v292
    %v294 = vpop.f32.mrb[0].mxu0
    %295 = vdwg.mxu0
    %296 = vst [vmem:[#allocation8] sm:$0xff] %v290
    %297 = vst [vmem:[#allocation8 + $0x8] sm:$0xff] %v293
    // Predicated region
    $region34: #{tpu_custom_call.1} parent=1 // pred_check
      _
    $region35: #{tpu_custom_call.1} parent=1 // pred_check_branch
      %299 = sbr.rel (0) target = $region37
    $region36: #{tpu_custom_call.1} parent=1 // pred_region
      %s301 = ssub.s32 256, 256
      %302 = vsyncadd [#allocation4], %s301
      %s303 = sshll.u32 [#allocation8], 4
      %s304 = int_to_ptr.vmem [resolvable:$true] %s303
      %309 = dma.vmem_to_hbm [thread:$0]  %s304, 256, %s5, [#allocation4], 128, 128, 8
    $region37: #{tpu_custom_call.1} parent=1 // pred_fallthru
      _
    // Predicated region
    $region38: #{tpu_custom_call.1} parent=1 // pred_check
      _
    $region39: #{tpu_custom_call.1} parent=1 // pred_check_branch
      %311 = sbr.rel (0) target = $region41
    $region40: #{tpu_custom_call.1} parent=1 // pred_region
      %s313 = ssub.s32 256, 256
      %314 = vsyncadd [#allocation10], %s313
      %s315 = sshll.u32 [#allocation9], 4
      %s316 = int_to_ptr.vmem [resolvable:$true] %s315
      %321 = dma.vmem_to_hbm [thread:$0]  %s316, 256, %s6, [#allocation10], 128, 128, 8
    $region41: #{tpu_custom_call.1} parent=1 // pred_fallthru
      _
    // Predicated region
    $region42: #{tpu_custom_call.1} parent=1 // pred_check
      _
    $region43: #{tpu_custom_call.1} parent=1 // pred_check_branch
      %323 = sbr.rel (0) target = $region45
    $region44: #{tpu_custom_call.1} parent=1 // pred_region
      %324 = dma.done [#allocation4], 256
    $region45: #{tpu_custom_call.1} parent=1 // pred_fallthru
      _
    // Predicated region
    $region46: #{tpu_custom_call.1} parent=1 // pred_check
      _
    $region47: #{tpu_custom_call.1} parent=1 // pred_check_branch
      %326 = sbr.rel (0) target = $region49
    $region48: #{tpu_custom_call.1} parent=1 // pred_region
      %327 = dma.done [#allocation10], 256
    $region49: #{tpu_custom_call.1} parent=1 // pred_fallthru
      _
    %328 = vsyncpa [#allocation3], 1
    %329 = vsyncpa [#allocation6], 1
    %330 = vsyncpa [#allocation4], 1
    %331 = vsyncpa [#allocation10], 1

// kernel: tpu_custom_call.1
$region0: #{tpu_custom_call.1}
  #allocation0 [shape = 'u32[]', space=smem, size = 0x4, offset = 0x4, fixed_abs, tag = 'smem constant byte address 0x4 - core index']
  #allocation1 [shape = 'u32[144,128]{1,0:T(1,128)}', space=vmem, size = 0x12000, scoped, tag = 'internal scratch']
  %s0 = inlined_call_operand.hbm [shape: f32[16,128], index: 0, kind: input, shape index: {}]
  %s1 = inlined_call_operand.hbm [shape: bf16[128,128], index: 1, kind: input, shape index: {}]
  %s2 = inlined_call_operand.vmem [shape: f32[1,128], index: 2, kind: input, shape index: {}]
  %s3 = inlined_call_operand.hbm [shape: bf16[128,128], index: 3, kind: input, shape index: {}]
  %s4 = inlined_call_operand.vmem [shape: f32[1,128], index: 4, kind: input, shape index: {}]
  %s5 = inlined_call_operand.hbm [shape: f32[16,128], index: 5, kind: output, shape index: {0}]
  %s6 = inlined_call_operand.hbm [shape: f32[16,128], index: 6, kind: output, shape index: {1}]
  %7 = xla_tuple %s5, %s6
  %s8 = sld [smem:[#allocation0]]
  $region50: #{tpu_custom_call.1} parent=0
    _
  %s10 = ssub.s32 1, %s8
  %s11 = scalar_select 0, %s10, %s8
  $region1: #{tpu_custom_call.1} parent=0
    #allocation2 [shape = 'u8[8192]{0}', space=vmem, size = 0x2000, scoped, tag = 'input window, operand 0, single buffered']
    #allocation3 [shape = 's32[1]{0}', space=sflag, size = 0x4, scoped, tag = 'scoped memory for tpu_custom_call.1']
    #allocation4 [shape = 's32[1]{0}', space=sflag, size = 0x4, scoped, tag = 'scoped memory for tpu_custom_call.1']
    #allocation5 [shape = 'u8[32768]{0}', space=vmem, size = 0x8000, scoped, tag = 'input window, operand 1, single buffered']
    #allocation6 [shape = 's32[1]{0}', space=sflag, size = 0x4, scoped, tag = 'scoped memory for tpu_custom_call.1']
    #allocation7 [shape = 'u8[32768]{0}', space=vmem, size = 0x8000, scoped, tag = 'input window, operand 3, single buffered']
    #allocation8 [shape = 'u8[8192]{0}', space=vmem, size = 0x2000, scoped, tag = 'output window, operand 0, single buffered']
    #allocation9 [shape = 'u8[8192]{0}', space=vmem, size = 0x2000, scoped, tag = 'output window, operand 1, single buffered']
    #allocation10 [shape = 's32[1]{0}', space=sflag, size = 0x4, scoped, tag = 'scoped memory for tpu_custom_call.1']
    %12 = vsyncpa [#allocation3], 0
    %13 = vsyncpa [#allocation6], 0
    %14 = vsyncpa [#allocation4], 0
    %15 = vsyncpa [#allocation10], 0
    // Predicated region
    $region2: #{tpu_custom_call.1} parent=1 // pred_check
      _
    $region3: #{tpu_custom_call.1} parent=1 // pred_check_branch
      %17 = sbr.rel (0) target = $region5
    $region4: #{tpu_custom_call.1} parent=1 // pred_region
      %s19 = ssub.s32 256, 256
      %20 = vsyncadd [#allocation3], %s19
      %s21 = sshll.u32 [#allocation2], 4
      %s22 = int_to_ptr.vmem [resolvable:$true] %s21
      %27 = dma.hbm_to_vmem [thread:$0]  %s0, 256, %s22, [#allocation3], 128, 128, 8
    $region5: #{tpu_custom_call.1} parent=1 // pred_fallthru
      _
    // Predicated region
    $region6: #{tpu_custom_call.1} parent=1 // pred_check
      _
    $region7: #{tpu_custom_call.1} parent=1 // pred_check_branch
      %29 = sbr.rel (0) target = $region9
    $region8: #{tpu_custom_call.1} parent=1 // pred_region
      %s31 = ssub.s32 1024, 1024
      %32 = vsyncadd [#allocation6], %s31
      %s33 = sshll.u32 [#allocation5], 4
      %s34 = int_to_ptr.vmem [resolvable:$true] %s33
      %39 = dma.hbm_to_vmem [thread:$0]  %s1, 1024, %s34, [#allocation6], 64, 64, 4
    $region9: #{tpu_custom_call.1} parent=1 // pred_fallthru
      _
    // Predicated region
    $region10: #{tpu_custom_call.1} parent=1 // pred_check
      _
    $region11: #{tpu_custom_call.1} parent=1 // pred_check_branch
      %41 = sbr.rel (0) target = $region13
    $region12: #{tpu_custom_call.1} parent=1 // pred_region
      _
    $region13: #{tpu_custom_call.1} parent=1 // pred_fallthru
      _
    // Predicated region
    $region14: #{tpu_custom_call.1} parent=1 // pred_check
      _
    $region15: #{tpu_custom_call.1} parent=1 // pred_check_branch
      %43 = sbr.rel (0) target = $region17
    $region16: #{tpu_custom_call.1} parent=1 // pred_region
      %s45 = ssub.s32 1024, 1024
      %46 = vsyncadd [#allocation6], %s45
      %s47 = sshll.u32 [#allocation7], 4
      %s48 = int_to_ptr.vmem [resolvable:$true] %s47
      %53 = dma.hbm_to_vmem [thread:$0]  %s3, 1024, %s48, [#allocation6], 64, 64, 4
    $region17: #{tpu_custom_call.1} parent=1 // pred_fallthru
      _
    // Predicated region
    $region18: #{tpu_custom_call.1} parent=1 // pred_check
      _
    $region19: #{tpu_custom_call.1} parent=1 // pred_check_branch
      %55 = sbr.rel (0) target = $region21
    $region20: #{tpu_custom_call.1} parent=1 // pred_region
      _
    $region21: #{tpu_custom_call.1} parent=1 // pred_fallthru
      _
    // Predicated region
    $region22: #{tpu_custom_call.1} parent=1 // pred_check
      _
    $region23: #{tpu_custom_call.1} parent=1 // pred_check_branch
      %57 = sbr.rel (0) target = $region25
    $region24: #{tpu_custom_call.1} parent=1 // pred_region
      %58 = dma.done [#allocation3], 256
    $region25: #{tpu_custom_call.1} parent=1 // pred_fallthru
      _
    // Predicated region
    $region26: #{tpu_custom_call.1} parent=1 // pred_check
      _
    $region27: #{tpu_custom_call.1} parent=1 // pred_check_branch
      %60 = sbr.rel (0) target = $region29
    $region28: #{tpu_custom_call.1} parent=1 // pred_region
      %61 = dma.done [#allocation6], 1024
    $region29: #{tpu_custom_call.1} parent=1 // pred_fallthru
      _
    // Predicated region
    $region30: #{tpu_custom_call.1} parent=1 // pred_check
      _
    $region31: #{tpu_custom_call.1} parent=1 // pred_check_branch
      %63 = sbr.rel (0) target = $region33
    $region32: #{tpu_custom_call.1} parent=1 // pred_region
      %64 = dma.done [#allocation6], 1024
    $region33: #{tpu_custom_call.1} parent=1 // pred_fallthru
      _
    %v66 = vld [vmem:[#allocation2] sm:$0xff]
    %v67 = vld [vmem:[#allocation2 + $0x8] sm:$0xff]
    %v68 = vpack.c.bf16 %v67, %v66
    %v69 = vld [vmem:[#allocation5] sm:$0xf]
    %v70 = vld [vmem:[#allocation5 + $0x4] sm:$0xf]
    %v71 = vld [vmem:[#allocation5 + $0x8] sm:$0xf]
    %v72 = vld [vmem:[#allocation5 + $0xc] sm:$0xf]
    %v73 = vld [vmem:[#allocation5 + $0x10] sm:$0xf]
    %v74 = vld [vmem:[#allocation5 + $0x14] sm:$0xf]
    %v75 = vld [vmem:[#allocation5 + $0x18] sm:$0xf]
    %v76 = vld [vmem:[#allocation5 + $0x1c] sm:$0xf]
    %v77 = vld [vmem:[#allocation5 + $0x20] sm:$0xf]
    %v78 = vld [vmem:[#allocation5 + $0x24] sm:$0xf]
    %v79 = vld [vmem:[#allocation5 + $0x28] sm:$0xf]
    %v80 = vld [vmem:[#allocation5 + $0x2c] sm:$0xf]
    %v81 = vld [vmem:[#allocation5 + $0x30] sm:$0xf]
    %v82 = vld [vmem:[#allocation5 + $0x34] sm:$0xf]
    %v83 = vld [vmem:[#allocation5 + $0x38] sm:$0xf]
    %v84 = vld [vmem:[#allocation5 + $0x3c] sm:$0xf]
    %v85 = vld [vmem:[%s2] sm:$0x1]
    %v87 = vlaneseq
    %v88 = vshrl.u32 %v87, 7
    %v89 = vsub.s32 0, %v88
    %v90 = vrot.slane %v85, %v89
    %v108 = vunpack.c.l.b16 %v69
    %v109 = vunpack.c.l.b16 %v70
    %v110 = vunpack.c.l.b16 %v71
    %v111 = vunpack.c.l.b16 %v72
    %v112 = vunpack.c.l.b16 %v73
    %v113 = vunpack.c.l.b16 %v74
    %v114 = vunpack.c.l.b16 %v75
    %v115 = vunpack.c.l.b16 %v76
    %v116 = vunpack.c.l.b16 %v77
    %v117 = vunpack.c.l.b16 %v78
    %v118 = vunpack.c.l.b16 %v79
    %v119 = vunpack.c.l.b16 %v80
    %v120 = vunpack.c.l.b16 %v81
    %v121 = vunpack.c.l.b16 %v82
    %v122 = vunpack.c.l.b16 %v83
    %v123 = vunpack.c.l.b16 %v84
    %v124 = vpack.c.b16 %v109, %v108
    %v125 = vpack.c.b16 %v111, %v110
    %v126 = vpack.c.b16 %v113, %v112
    %v127 = vpack.c.b16 %v115, %v114
    %v128 = vpack.c.b16 %v117, %v116
    %v129 = vpack.c.b16 %v119, %v118
    %v130 = vpack.c.b16 %v121, %v120
    %v131 = vpack.c.b16 %v123, %v122
    %140 = vmatprep.subr.bf16.mxu0 0
    %141 = vmatpush1.bf16.msra.mxu0 %v124
    %142 = vmatprep.subr.bf16.mxu0 0
    %143 = vmatpush1.bf16.msra.mxu0 %v125
    %144 = vmatprep.subr.bf16.mxu0 0
    %145 = vmatpush1.bf16.msra.mxu0 %v126
    %146 = vmatprep.subr.bf16.mxu0 0
    %147 = vmatpush1.bf16.msra.mxu0 %v127
    %148 = vmatprep.subr.bf16.mxu0 0
    %149 = vmatpush1.bf16.msra.mxu0 %v128
    %150 = vmatprep.subr.bf16.mxu0 0
    %151 = vmatpush1.bf16.msra.mxu0 %v129
    %152 = vmatprep.subr.bf16.mxu0 0
    %153 = vmatpush1.bf16.msra.mxu0 %v130
    %154 = vmatprep.subr.bf16.mxu0 0
    %155 = vmatpush1.bf16.msra.mxu0 %v131
    %156 = vmatprep.subr.bf16.mxu0 0
    %157 = vmatpush1.bf16.msra.mxu0 0
    %158 = vmatprep.subr.bf16.mxu0 0
    %159 = vmatpush1.bf16.msra.mxu0 0
    %160 = vmatprep.subr.bf16.mxu0 0
    %161 = vmatpush1.bf16.msra.mxu0 0
    %162 = vmatprep.subr.bf16.mxu0 0
    %163 = vmatpush1.bf16.msra.mxu0 0
    %164 = vmatprep.subr.bf16.mxu0 0
    %165 = vmatpush1.bf16.msra.mxu0 0
    %166 = vmatprep.subr.bf16.mxu0 0
    %167 = vmatpush1.bf16.msra.mxu0 0
    %168 = vmatprep.subr.bf16.mxu0 0
    %169 = vmatpush1.bf16.msra.mxu0 0
    %170 = vmatprep.subr.bf16.mxu0 0
    %171 = vmatpush1.bf16.msra.mxu0 0
    %172 = vmatprep.mubr.bf16.mxu0 0
    %173 = vmatmul.mubr.bf16.gmra.mrb[0].mxu0 %v68
    %v174 = vpop.f32.mrb[0].mxu0
    %v175 = vadd.f32 %v90, %v174
    %v176 = vpop.f32.mrb[0].mxu0
    %v177 = vpop.f32.mrb[0].mxu0
    %v178 = vadd.f32 %v90, %v177
    %v179 = vpop.f32.mrb[0].mxu0
    %180 = vdwg.mxu0
    %181 = vst [vmem:[#allocation9] sm:$0xff] %v175
    %182 = vst [vmem:[#allocation9 + $0x8] sm:$0xff] %v178
    %v183 = vpack.c.bf16 %v178, %v175
    %v184 = vld [vmem:[#allocation7] sm:$0xf]
    %v185 = vld [vmem:[#allocation7 + $0x4] sm:$0xf]
    %v186 = vld [vmem:[#allocation7 + $0x8] sm:$0xf]
    %v187 = vld [vmem:[#allocation7 + $0xc] sm:$0xf]
    %v188 = vld [vmem:[#allocation7 + $0x10] sm:$0xf]
    %v189 = vld [vmem:[#allocation7 + $0x14] sm:$0xf]
    %v190 = vld [vmem:[#allocation7 + $0x18] sm:$0xf]
    %v191 = vld [vmem:[#allocation7 + $0x1c] sm:$0xf]
    %v192 = vld [vmem:[#allocation7 + $0x20] sm:$0xf]
    %v193 = vld [vmem:[#allocation7 + $0x24] sm:$0xf]
    %v194 = vld [vmem:[#allocation7 + $0x28] sm:$0xf]
    %v195 = vld [vmem:[#allocation7 + $0x2c] sm:$0xf]
    %v196 = vld [vmem:[#allocation7 + $0x30] sm:$0xf]
    %v197 = vld [vmem:[#allocation7 + $0x34] sm:$0xf]
    %v198 = vld [vmem:[#allocation7 + $0x38] sm:$0xf]
    %v199 = vld [vmem:[#allocation7 + $0x3c] sm:$0xf]
    %v200 = vld [vmem:[%s4] sm:$0x1]
    %v202 = vlaneseq
    %v203 = vshrl.u32 %v202, 7
    %v204 = vsub.s32 0, %v203
    %v205 = vrot.slane %v200, %v204
    %v223 = vunpack.c.l.b16 %v184
    %v224 = vunpack.c.l.b16 %v185
    %v225 = vunpack.c.l.b16 %v186
    %v226 = vunpack.c.l.b16 %v187
    %v227 = vunpack.c.l.b16 %v188
    %v228 = vunpack.c.l.b16 %v189
    %v229 = vunpack.c.l.b16 %v190
    %v230 = vunpack.c.l.b16 %v191
    %v231 = vunpack.c.l.b16 %v192
    %v232 = vunpack.c.l.b16 %v193
    %v233 = vunpack.c.l.b16 %v194
    %v234 = vunpack.c.l.b16 %v195
    %v235 = vunpack.c.l.b16 %v196
    %v236 = vunpack.c.l.b16 %v197
    %v237 = vunpack.c.l.b16 %v198
    %v238 = vunpack.c.l.b16 %v199
    %v239 = vpack.c.b16 %v224, %v223
    %v240 = vpack.c.b16 %v226, %v225
    %v241 = vpack.c.b16 %v228, %v227
    %v242 = vpack.c.b16 %v230, %v229
    %v243 = vpack.c.b16 %v232, %v231
    %v244 = vpack.c.b16 %v234, %v233
    %v245 = vpack.c.b16 %v236, %v235
    %v246 = vpack.c.b16 %v238, %v237
    %255 = vmatprep.subr.bf16.mxu0 0
    %256 = vmatpush1.bf16.msra.mxu0 %v239
    %257 = vmatprep.subr.bf16.mxu0 0
    %258 = vmatpush1.bf16.msra.mxu0 %v240
    %259 = vmatprep.subr.bf16.mxu0 0
    %260 = vmatpush1.bf16.msra.mxu0 %v241
    %261 = vmatprep.subr.bf16.mxu0 0
    %262 = vmatpush1.bf16.msra.mxu0 %v242
    %263 = vmatprep.subr.bf16.mxu0 0
    %264 = vmatpush1.bf16.msra.mxu0 %v243
    %265 = vmatprep.subr.bf16.mxu0 0
    %266 = vmatpush1.bf16.msra.mxu0 %v244
    %267 = vmatprep.subr.bf16.mxu0 0
    %268 = vmatpush1.bf16.msra.mxu0 %v245
    %269 = vmatprep.subr.bf16.mxu0 0
    %270 = vmatpush1.bf16.msra.mxu0 %v246
    %271 = vmatprep.subr.bf16.mxu0 0
    %272 = vmatpush1.bf16.msra.mxu0 0
    %273 = vmatprep.subr.bf16.mxu0 0
    %274 = vmatpush1.bf16.msra.mxu0 0
    %275 = vmatprep.subr.bf16.mxu0 0
    %276 = vmatpush1.bf16.msra.mxu0 0
    %277 = vmatprep.subr.bf16.mxu0 0
    %278 = vmatpush1.bf16.msra.mxu0 0
    %279 = vmatprep.subr.bf16.mxu0 0
    %280 = vmatpush1.bf16.msra.mxu0 0
    %281 = vmatprep.subr.bf16.mxu0 0
    %282 = vmatpush1.bf16.msra.mxu0 0
    %283 = vmatprep.subr.bf16.mxu0 0
    %284 = vmatpush1.bf16.msra.mxu0 0
    %285 = vmatprep.subr.bf16.mxu0 0
    %286 = vmatpush1.bf16.msra.mxu0 0
    %287 = vmatprep.mubr.bf16.mxu0 0
    %288 = vmatmul.mubr.bf16.gmra.mrb[0].mxu0 %v183
    %v289 = vpop.f32.mrb[0].mxu0
    %v290 = vadd.f32 %v205, %v289
    %v291 = vpop.f32.mrb[0].mxu0
    %v292 = vpop.f32.mrb[0].mxu0
    %v293 = vadd.f32 %v205, %v292
    %v294 = vpop.f32.mrb[0].mxu0
    %295 = vdwg.mxu0
    %296 = vst [vmem:[#allocation8] sm:$0xff] %v290
    %297 = vst [vmem:[#allocation8 + $0x8] sm:$0xff] %v293
    // Predicated region
    $region34: #{tpu_custom_call.1} parent=1 // pred_check
      _
    $region35: #{tpu_custom_call.1} parent=1 // pred_check_branch
      %299 = sbr.rel (0) target = $region37
    $region36: #{tpu_custom_call.1} parent=1 // pred_region
      %s301 = ssub.s32 256, 256
      %302 = vsyncadd [#allocation4], %s301
      %s303 = sshll.u32 [#allocation8], 4
      %s304 = int_to_ptr.vmem [resolvable:$true] %s303
      %309 = dma.vmem_to_hbm [thread:$0]  %s304, 256, %s5, [#allocation4], 128, 128, 8
    $region37: #{tpu_custom_call.1} parent=1 // pred_fallthru
      _
    // Predicated region
    $region38: #{tpu_custom_call.1} parent=1 // pred_check
      _
    $region39: #{tpu_custom_call.1} parent=1 // pred_check_branch
      %311 = sbr.rel (0) target = $region41
    $region40: #{tpu_custom_call.1} parent=1 // pred_region
      %s313 = ssub.s32 256, 256
      %314 = vsyncadd [#allocation10], %s313
      %s315 = sshll.u32 [#allocation9], 4
      %s316 = int_to_ptr.vmem [resolvable:$true] %s315
      %321 = dma.vmem_to_hbm [thread:$0]  %s316, 256, %s6, [#allocation10], 128, 128, 8
    $region41: #{tpu_custom_call.1} parent=1 // pred_fallthru
      _
    // Predicated region
    $region42: #{tpu_custom_call.1} parent=1 // pred_check
      _
    $region43: #{tpu_custom_call.1} parent=1 // pred_check_branch
      %323 = sbr.rel (0) target = $region45
    $region44: #{tpu_custom_call.1} parent=1 // pred_region
      %324 = dma.done [#allocation4], 256
    $region45: #{tpu_custom_call.1} parent=1 // pred_fallthru
      _
    // Predicated region
    $region46: #{tpu_custom_call.1} parent=1 // pred_check
      _
    $region47: #{tpu_custom_call.1} parent=1 // pred_check_branch
      %326 = sbr.rel (0) target = $region49
    $region48: #{tpu_custom_call.1} parent=1 // pred_region
      %327 = dma.done [#allocation10], 256
    $region49: #{tpu_custom_call.1} parent=1 // pred_fallthru
      _
    %328 = vsyncpa [#allocation3], 1
    %329 = vsyncpa [#allocation6], 1
    %330 = vsyncpa [#allocation4], 1
    %331 = vsyncpa [#allocation10], 1

</llo_original>
